<compile_context>
chip_gen: v5e
topology: v5e:2x2
jax: 0.10.0
libtpu: 0.0.40
codegen_flags: <defaults>
</compile_context>

<pallas_src>
import functools

import jax
import jax.numpy as jnp
from jax import lax
from jax.experimental import pallas as pl
from jax.experimental.pallas import tpu as pltpu


def _global_attn_kernel(inp_ref, ctx_ref, wc_ref, wx_ref,
                        attn_ref, align_ref, concat_ref,
                        *, dim, compute_dtype, approx_recip):
    x = inp_ref[...]                         # (Bb, tT, D)  input dtype (needed for concat)
    hm = ctx_ref[...]                        # (Bb, S,  D)  already in compute dtype
    xm = x.astype(compute_dtype)

    # --- scores: batched h_t . h_s over the feature dim (no ctx transpose) ---
    scores = lax.dot_general(
        xm, hm,
        dimension_numbers=(((2,), (2,)), ((0,), (0,))),
        preferred_element_type=jnp.float32)               # (Bb, tT, S) f32

    # --- softmax over src_len (f32) ---
    m = jnp.max(scores, axis=-1, keepdims=True)
    e = jnp.exp(scores - m)
    denom = jnp.sum(e, axis=-1, keepdims=True)
    p = e * pl.reciprocal(denom, approx=approx_recip)     # (Bb, tT, S) f32

    # --- context vector: batched p @ h ---
    c = lax.dot_general(
        p.astype(compute_dtype), hm,
        dimension_numbers=(((2,), (1,)), ((0,), (0,))),
        preferred_element_type=jnp.float32)               # (Bb, tT, D) f32

    # --- linear_out (no bias) with split weights, then tanh ---
    bb, tt, d = x.shape
    c2 = c.reshape(bb * tt, d).astype(compute_dtype)      # pure relabel (tt%8==0 or bb==1)
    x2 = xm.reshape(bb * tt, d)
    pre = (jnp.dot(c2, wc_ref[...],
                   preferred_element_type=jnp.float32) +
           jnp.dot(x2, wx_ref[...],
                   preferred_element_type=jnp.float32))
    out = jnp.tanh(pre).reshape(bb, tt, d)

    attn_ref[...] = out.astype(attn_ref.dtype)
    align_ref[...] = p.astype(align_ref.dtype)
    # concat_c = [c, input]: two lane-slice stores, no concatenate.
    concat_ref[:, :, :dim] = c.astype(concat_ref.dtype)
    concat_ref[:, :, dim:] = x.astype(concat_ref.dtype)


def _pick_t_tile(t, cap=256):
    """Largest divisor of t that is <= cap and a multiple of 8 (or t itself)."""
    best = 0
    for d in range(1, t + 1):
        if t % d == 0 and d <= cap and (d % 8 == 0 or d == t):
            best = max(best, d)
    return best if best else t


def _pick_b_tile(b, t_blk, s, d):
    """Largest divisor of b keeping the per-step block footprint modest (~4MiB)."""
    per_batch = 4 * (t_blk * d + s * d + t_blk * s + t_blk * 4 * d)  # f32 bytes
    cap = max(1, min(8, (4 * 1024 * 1024) // max(per_batch, 1)))
    best = 1
    for dd in range(1, b + 1):
        if b % dd == 0 and dd <= cap:
            best = max(best, dd)
    return best


@functools.partial(jax.jit, static_argnames=("fast", "transpose_outputs"))
def _global_attention_3d(inp, ctx, w_out, *, fast=False, transpose_outputs=True):
    B, T, D = inp.shape
    _, S, _ = ctx.shape

    compute_dtype = jnp.bfloat16 if fast else inp.dtype

    # Split linear_out weight: attn = tanh(c @ Wc + x @ Wx); no concat before MXU.
    # Pre-cast weights (and context, fast path) so the kernel does no per-step casts
    # and the context DMA is halved when fast=True.
    wc = jnp.transpose(w_out[:, :D]).astype(compute_dtype)   # (D, D)
    wx = jnp.transpose(w_out[:, D:]).astype(compute_dtype)   # (D, D)
    ctx_c = ctx.astype(compute_dtype)

    t_blk = _pick_t_tile(T)
    b_blk = _pick_b_tile(B, t_blk, S, D)
    if t_blk % 8 != 0:
        b_blk = 1   # keep the in-kernel (Bb*tT, D) flatten a pure relabel

    kernel = functools.partial(
        _global_attn_kernel, dim=D,
        compute_dtype=compute_dtype, approx_recip=fast)

    out_shapes = (
        jax.ShapeDtypeStruct((B, T, D), inp.dtype),
        jax.ShapeDtypeStruct((B, T, S), jnp.float32),
        jax.ShapeDtypeStruct((B, T, 2 * D), inp.dtype),
    )

    grid_spec = pltpu.PrefetchScalarGridSpec(
        num_scalar_prefetch=0,
        grid=(B // b_blk, T // t_blk),
        in_specs=[
            pl.BlockSpec((b_blk, t_blk, D), lambda bi, ti: (bi, ti, 0)),
            pl.BlockSpec((b_blk, S, D), lambda bi, ti: (bi, 0, 0)),  # resident over ti
            pl.BlockSpec((D, D), lambda bi, ti: (0, 0)),             # Wc resident
            pl.BlockSpec((D, D), lambda bi, ti: (0, 0)),             # Wx resident
        ],
        out_specs=[
            pl.BlockSpec((b_blk, t_blk, D), lambda bi, ti: (bi, ti, 0)),
            pl.BlockSpec((b_blk, t_blk, S), lambda bi, ti: (bi, ti, 0)),
            pl.BlockSpec((b_blk, t_blk, 2 * D), lambda bi, ti: (bi, ti, 0)),
        ],
    )

    # Scoped-VMEM hint sized to the (double-buffered) block footprint;
    # v5e's 16 MiB default is the tight one.  Cap leaves headroom on v7x (64 MiB phys).
    est = 8 * (b_blk * (t_blk * D + S * D + t_blk * (3 * D + S)) + 2 * D * D)
    vmem_limit = int(min(48 * 1024 * 1024, max(32 * 1024 * 1024, 2 * est)))

    attn_h, align, concat_c = pl.pallas_call(
        kernel,
        out_shape=out_shapes,
        grid_spec=grid_spec,
        compiler_params=pltpu.CompilerParams(
            dimension_semantics=("parallel", "parallel"),
            vmem_limit_bytes=vmem_limit,
        ),
    )(inp, ctx_c, wc, wx)

    if transpose_outputs:
        # PyTorch's .transpose(0, 1).contiguous() -> (tgt_len, batch, ...)
        attn_h = jnp.transpose(attn_h, (1, 0, 2))
        align = jnp.transpose(align, (1, 0, 2))
        concat_c = jnp.transpose(concat_c, (1, 0, 2))
    return attn_h, align, concat_c


def global_attention(inp, ctx, w_out, *, fast=False, transpose_outputs=True):
    """
    inp:   (B, T, D) decoder output, or (B, D) for one_step.
    ctx:   (B, S, D) encoder states.
    w_out: (D, 2D)   nn.Linear(dim + context_size, dim, bias=False).weight

    Returns (attn_h, align_vectors, concat_c):
      3-D input, transpose_outputs=True  -> PyTorch layout (T, B, D), (T, B, S), (T, B, 2D)
      3-D input, transpose_outputs=False -> batch-major (B, T, ...) (no extra HBM pass)
      2-D input (one_step)               -> (B, D), (B, S), (B, 2D), matching PyTorch.
    """
    if inp.ndim == 2:
        a, p, c = _global_attention_3d(inp[:, None, :], ctx, w_out,
                                       fast=fast, transpose_outputs=False)
        return a[:, 0, :], p[:, 0, :], c[:, 0, :]
    return _global_attention_3d(inp, ctx, w_out, fast=fast,
                                transpose_outputs=transpose_outputs)


def _reference(inp, ctx, w_out):
    scores = jnp.einsum("btd,bsd->bts", inp, ctx)
    p = jax.nn.softmax(scores, axis=-1)
    c = jnp.einsum("bts,bsd->btd", p, ctx)
    concat = jnp.concatenate([c, inp], axis=-1)
    attn = jnp.tanh(jnp.einsum("btk,dk->btd", concat, w_out))
    return (jnp.transpose(attn, (1, 0, 2)),
            jnp.transpose(p, (1, 0, 2)),
            jnp.transpose(concat, (1, 0, 2)))


if __name__ == "__main__":
    B, T, S, D = 2, 8, 8, 32

    key = jax.random.PRNGKey(0)
    k_inp, k_ctx, k_w = jax.random.split(key, 3)
    inp = jax.random.normal(k_inp, (B, T, D), dtype=jnp.float32)
    ctx = jax.random.normal(k_ctx, (B, S, D), dtype=jnp.float32)
    # nn.Linear(dim + context_size, dim, bias=False) weight: (D, 2D)
    bound = 1.0 / jnp.sqrt(2.0 * D)
    w_out = jax.random.uniform(k_w, (D, 2 * D), minval=-bound, maxval=bound,
                               dtype=jnp.float32)

    ref_attn, ref_align, ref_concat = _reference(inp, ctx, w_out)

    # Exact (f32) path, PyTorch (T, B, ...) output layout.
    attn_h, align, concat_c = global_attention(inp, ctx, w_out)
    jax.block_until_ready((attn_h, align, concat_c))
    assert jnp.allclose(attn_h, ref_attn, atol=2e-5, rtol=2e-5)
    assert jnp.allclose(align, ref_align, atol=2e-5, rtol=2e-5)
    assert jnp.allclose(concat_c, ref_concat, atol=2e-5, rtol=2e-5)

    # Fast path: bf16 MXU operands + approx reciprocal (looser tolerance).
    attn_f, align_f, concat_f = global_attention(inp, ctx, w_out, fast=True)
    jax.block_until_ready((attn_f, align_f, concat_f))
    assert jnp.allclose(attn_f, ref_attn, atol=5e-2, rtol=5e-2)
    assert jnp.allclose(align_f, ref_align, atol=5e-2, rtol=5e-2)
    assert jnp.allclose(concat_f, ref_concat, atol=5e-2, rtol=5e-2)

    # One-step (2-D input) path, matching PyTorch's squeeze semantics.
    attn_1, align_1, concat_1 = global_attention(inp[:, 0, :], ctx, w_out)
    jax.block_until_ready((attn_1, align_1, concat_1))
    assert jnp.allclose(attn_1, ref_attn[0], atol=2e-5, rtol=2e-5)
    assert jnp.allclose(align_1, ref_align[0], atol=2e-5, rtol=2e-5)
    assert jnp.allclose(concat_1, ref_concat[0], atol=2e-5, rtol=2e-5)

    print("KERNEL_OK")
</pallas_src>

<mosaic_0001>
module attributes {stable_mosaic.version = 11 : i64} {
  func.func @_global_attn_kernel(%arg0: i32, %arg1: i32, %arg2: memref<2x8x32xf32, #tpu.memory_space<vmem>>, %arg3: memref<2x8x32xf32, #tpu.memory_space<vmem>>, %arg4: memref<32x32xf32, #tpu.memory_space<vmem>>, %arg5: memref<32x32xf32, #tpu.memory_space<vmem>>, %arg6: memref<2x8x32xf32, #tpu.memory_space<vmem>>, %arg7: memref<2x8x8xf32, #tpu.memory_space<vmem>>, %arg8: memref<2x8x64xf32, #tpu.memory_space<vmem>>) attributes {dimension_semantics = [#tpu.dimension_semantics<parallel>, #tpu.dimension_semantics<parallel>], iteration_bounds = array<i64: 1, 1>, scalar_prefetch = 0 : i64, scratch_operands = 0 : i64, tpu.core_type = #tpu.core_type<tc>, window_params = [{transform_indices = @transform_0, window_bounds = array<i64: 2, 8, 32>}, {transform_indices = @transform_1, window_bounds = array<i64: 2, 8, 32>}, {pipeline_mode = #tpu.pipeline_mode<synchronous>, transform_indices = @transform_2, window_bounds = array<i64: 32, 32>}, {pipeline_mode = #tpu.pipeline_mode<synchronous>, transform_indices = @transform_3, window_bounds = array<i64: 32, 32>}, {transform_indices = @transform_4, window_bounds = array<i64: 2, 8, 32>}, {transform_indices = @transform_5, window_bounds = array<i64: 2, 8, 8>}, {transform_indices = @transform_6, window_bounds = array<i64: 2, 8, 64>}]} {
    %c0 = arith.constant 0 : index
    %c0_0 = arith.constant 0 : index
    %c0_1 = arith.constant 0 : index
    %0 = vector.load %arg2[%c0, %c0_0, %c0_1] : memref<2x8x32xf32, #tpu.memory_space<vmem>>, vector<2x8x32xf32>
    %c0_2 = arith.constant 0 : index
    %c0_3 = arith.constant 0 : index
    %c0_4 = arith.constant 0 : index
    %1 = vector.load %arg3[%c0_2, %c0_3, %c0_4] : memref<2x8x32xf32, #tpu.memory_space<vmem>>, vector<2x8x32xf32>
    %cst = arith.constant dense<0.000000e+00> : vector<2x8x8xf32>
    %2 = tpu.matmul %0, %1, %cst {dimension_numbers = #tpu.dot_dimension_numbers<[2], [2], [1], [1], [0, 0, 0, 1, 1, 1], [0], [0]>} : vector<2x8x32xf32>, vector<2x8x32xf32>, vector<2x8x8xf32> -> vector<2x8x8xf32>
    %cst_5 = arith.constant dense<0xFF800000> : vector<2x8xf32>
    %3 = vector.multi_reduction <maximumf>, %2, %cst_5 [2] : vector<2x8x8xf32> to vector<2x8xf32>
    %4 = vector.shape_cast %3 : vector<2x8xf32> to vector<2x8x1xf32>
    %5 = vector.broadcast %4 : vector<2x8x1xf32> to vector<2x8x8xf32>
    %6 = arith.subf %2, %5 : vector<2x8x8xf32>
    %7 = math.exp %6 : vector<2x8x8xf32>
    %cst_6 = arith.constant dense<0.000000e+00> : vector<2x8xf32>
    %8 = vector.multi_reduction <add>, %7, %cst_6 [2] : vector<2x8x8xf32> to vector<2x8xf32>
    %9 = vector.shape_cast %8 : vector<2x8xf32> to vector<2x8x1xf32>
    %10 = tpu.reciprocal %9 : vector<2x8x1xf32> -> vector<2x8x1xf32>
    %11 = vector.broadcast %10 : vector<2x8x1xf32> to vector<2x8x8xf32>
    %12 = arith.mulf %7, %11 : vector<2x8x8xf32>
    %cst_7 = arith.constant dense<0.000000e+00> : vector<2x8x32xf32>
    %13 = tpu.matmul %12, %1, %cst_7 {dimension_numbers = #tpu.dot_dimension_numbers<[2], [1], [1], [2], [0, 0, 0, 1, 1, 2], [0], [0]>} : vector<2x8x8xf32>, vector<2x8x32xf32>, vector<2x8x32xf32> -> vector<2x8x32xf32>
    %14 = vector.shape_cast %13 : vector<2x8x32xf32> to vector<16x32xf32>
    %15 = vector.shape_cast %0 : vector<2x8x32xf32> to vector<16x32xf32>
    %c0_8 = arith.constant 0 : index
    %c0_9 = arith.constant 0 : index
    %16 = vector.load %arg4[%c0_8, %c0_9] : memref<32x32xf32, #tpu.memory_space<vmem>>, vector<32x32xf32>
    %cst_10 = arith.constant dense<0.000000e+00> : vector<16x32xf32>
    %17 = tpu.matmul %14, %16, %cst_10 {dimension_numbers = #tpu.dot_dimension_numbers<[1], [0], [0], [1], [0, 0, 1, 1], [], []>} : vector<16x32xf32>, vector<32x32xf32>, vector<16x32xf32> -> vector<16x32xf32>
    %c0_11 = arith.constant 0 : index
    %c0_12 = arith.constant 0 : index
    %18 = vector.load %arg5[%c0_11, %c0_12] : memref<32x32xf32, #tpu.memory_space<vmem>>, vector<32x32xf32>
    %cst_13 = arith.constant dense<0.000000e+00> : vector<16x32xf32>
    %19 = tpu.matmul %15, %18, %cst_13 {dimension_numbers = #tpu.dot_dimension_numbers<[1], [0], [0], [1], [0, 0, 1, 1], [], []>} : vector<16x32xf32>, vector<32x32xf32>, vector<16x32xf32> -> vector<16x32xf32>
    %20 = arith.addf %17, %19 : vector<16x32xf32>
    %21 = math.tanh %20 : vector<16x32xf32>
    %22 = vector.shape_cast %21 : vector<16x32xf32> to vector<2x8x32xf32>
    %c0_14 = arith.constant 0 : index
    %c0_15 = arith.constant 0 : index
    %c0_16 = arith.constant 0 : index
    %23 = vector.load %arg6[%c0_14, %c0_15, %c0_16] : memref<2x8x32xf32, #tpu.memory_space<vmem>>, vector<2x8x32xf32>
    tpu.vector_store %arg6[%c0_14, %c0_15, %c0_16], %22 {strides = array<i32>} : memref<2x8x32xf32, #tpu.memory_space<vmem>>, vector<2x8x32xf32>,
    %c0_17 = arith.constant 0 : index
    %c0_18 = arith.constant 0 : index
    %c0_19 = arith.constant 0 : index
    %24 = vector.load %arg7[%c0_17, %c0_18, %c0_19] : memref<2x8x8xf32, #tpu.memory_space<vmem>>, vector<2x8x8xf32>
    tpu.vector_store %arg7[%c0_17, %c0_18, %c0_19], %12 {strides = array<i32>} : memref<2x8x8xf32, #tpu.memory_space<vmem>>, vector<2x8x8xf32>,
    %c0_20 = arith.constant 0 : index
    %c0_21 = arith.constant 0 : index
    %c0_22 = arith.constant 0 : index
    %25 = vector.load %arg8[%c0_20, %c0_21, %c0_22] : memref<2x8x64xf32, #tpu.memory_space<vmem>>, vector<2x8x32xf32>
    tpu.vector_store %arg8[%c0_20, %c0_21, %c0_22], %13 {strides = array<i32>} : memref<2x8x64xf32, #tpu.memory_space<vmem>>, vector<2x8x32xf32>,
    %c0_23 = arith.constant 0 : index
    %c0_24 = arith.constant 0 : index
    %c32 = arith.constant 32 : index
    %26 = vector.load %arg8[%c0_23, %c0_24, %c32] : memref<2x8x64xf32, #tpu.memory_space<vmem>>, vector<2x8x32xf32>
    tpu.vector_store %arg8[%c0_23, %c0_24, %c32], %0 {strides = array<i32>} : memref<2x8x64xf32, #tpu.memory_space<vmem>>, vector<2x8x32xf32>,
    return
  }
  func.func @transform_0(%arg0: i32, %arg1: i32) -> (i32, i32, i32) {
    %c0_i32 = arith.constant 0 : i32
    %c0_i32_0 = arith.constant 0 : i32
    return %arg0, %arg1, %c0_i32 : i32, i32, i32
  }
  func.func @transform_1(%arg0: i32, %arg1: i32) -> (i32, i32, i32) {
    %c0_i32 = arith.constant 0 : i32
    %c0_i32_0 = arith.constant 0 : i32
    %c0_i32_1 = arith.constant 0 : i32
    return %arg0, %c0_i32, %c0_i32_0 : i32, i32, i32
  }
  func.func @transform_2(%arg0: i32, %arg1: i32) -> (i32, i32) {
    %c0_i32 = arith.constant 0 : i32
    %c0_i32_0 = arith.constant 0 : i32
    %c0_i32_1 = arith.constant 0 : i32
    return %c0_i32, %c0_i32_0 : i32, i32
  }
  func.func @transform_3(%arg0: i32, %arg1: i32) -> (i32, i32) {
    %c0_i32 = arith.constant 0 : i32
    %c0_i32_0 = arith.constant 0 : i32
    %c0_i32_1 = arith.constant 0 : i32
    return %c0_i32, %c0_i32_0 : i32, i32
  }
  func.func @transform_4(%arg0: i32, %arg1: i32) -> (i32, i32, i32) {
    %c0_i32 = arith.constant 0 : i32
    %c0_i32_0 = arith.constant 0 : i32
    return %arg0, %arg1, %c0_i32 : i32, i32, i32
  }
  func.func @transform_5(%arg0: i32, %arg1: i32) -> (i32, i32, i32) {
    %c0_i32 = arith.constant 0 : i32
    %c0_i32_0 = arith.constant 0 : i32
    return %arg0, %arg1, %c0_i32 : i32, i32, i32
  }
  func.func @transform_6(%arg0: i32, %arg1: i32) -> (i32, i32, i32) {
    %c0_i32 = arith.constant 0 : i32
    %c0_i32_0 = arith.constant 0 : i32
    return %arg0, %arg1, %c0_i32 : i32, i32, i32
  }
}

</mosaic_0001>

<llo_original>
// kernel: _global_attention_3d.1
$region0: #{_global_attention_3d.1}
  #allocation0 [shape = 'u32[]', space=smem, size = 0x4, offset = 0x4, fixed_abs, tag = 'smem constant byte address 0x4 - core index']
  #allocation1 [shape = 'u32[72,128]{1,0:T(1,128)}', space=vmem, size = 0x9000, scoped, tag = 'internal scratch']
  %s0 = inlined_call_operand.vmem [shape: f32[2,8,32], index: 0, kind: input, shape index: {}]
  %s1 = inlined_call_operand.vmem [shape: f32[2,8,32], index: 1, kind: input, shape index: {}]
  %s2 = inlined_call_operand.vmem [shape: f32[32,32], index: 2, kind: input, shape index: {}]
  %s3 = inlined_call_operand.vmem [shape: f32[32,32], index: 3, kind: input, shape index: {}]
  %s4 = inlined_call_operand.vmem [shape: f32[2,8,32], index: 4, kind: output, shape index: {0}]
  %s5 = inlined_call_operand.vmem [shape: f32[2,8,8], index: 5, kind: output, shape index: {1}]
  %s6 = inlined_call_operand.vmem [shape: f32[2,8,64], index: 6, kind: output, shape index: {2}]
  %7 = xla_tuple %s4, %s5, %s6
  %s8 = sld [smem:[#allocation0]]
  $region42: #{_global_attention_3d.1} parent=0
    _
  %s10 = ssub.s32 1, %s8
  %s11 = scalar_select 0, %s10, %s8
  // Predicated region
  $region2: #{_global_attention_3d.1} parent=0 // pred_check
    _
  $region3: #{_global_attention_3d.1} parent=0 // pred_check_branch
    %13 = sbr.rel (0) target = $region5
  $region4: #{_global_attention_3d.1} parent=0 // pred_region
    _
  $region5: #{_global_attention_3d.1} parent=0 // pred_fallthru
    _
  // Predicated region
  $region6: #{_global_attention_3d.1} parent=0 // pred_check
    _
  $region7: #{_global_attention_3d.1} parent=0 // pred_check_branch
    %15 = sbr.rel (0) target = $region9
  $region8: #{_global_attention_3d.1} parent=0 // pred_region
    _
  $region9: #{_global_attention_3d.1} parent=0 // pred_fallthru
    _
  // Predicated region
  $region10: #{_global_attention_3d.1} parent=0 // pred_check
    _
  $region11: #{_global_attention_3d.1} parent=0 // pred_check_branch
    %17 = sbr.rel (0) target = $region13
  $region12: #{_global_attention_3d.1} parent=0 // pred_region
    _
  $region13: #{_global_attention_3d.1} parent=0 // pred_fallthru
    _
  // Predicated region
  $region14: #{_global_attention_3d.1} parent=0 // pred_check
    _
  $region15: #{_global_attention_3d.1} parent=0 // pred_check_branch
    %19 = sbr.rel (0) target = $region17
  $region16: #{_global_attention_3d.1} parent=0 // pred_region
    _
  $region17: #{_global_attention_3d.1} parent=0 // pred_fallthru
    _
  %v20 = vld [vmem:[%s0] sm:$0xff]
  %v21 = vld [vmem:[%s0 + $0x8] sm:$0xff]
  %v22 = vld [vmem:[%s1] sm:$0xff]
  %v23 = vld [vmem:[%s1 + $0x8] sm:$0xff]
  %vm24 = vcmask 261120
  %v26 = vsel %vm24, %v20, 0
  %v29 = vsel %vm24, %v22, 0
  %31 = vmatpush.xpose.msra.mxu0 0.0
  %32 = vmatpush.xpose.msra.mxu0 0.0
  %33 = vmatpush.xpose.msra.mxu0 0.0
  %34 = vmatpush.xpose.msra.mxu0 0.0
  %35 = vmatpush.xpose.msra.mxu0 0.0
  %36 = vmatpush.xpose.msra.mxu0 0.0
  %37 = vmatpush.xpose.msra.mxu0 0.0
  %38 = vmatpush.xpose.msra.mxu0 0.0
  %39 = vmatpush.xpose.msra.mxu0 0.0
  %40 = vmatpush.xpose.msra.mxu0 0.0
  %41 = vmatpush.xpose.msra.mxu0 0.0
  %42 = vmatpush.xpose.msra.mxu0 0.0
  %43 = vmatpush.xpose.msra.mxu0 0.0
  %44 = vmatpush.xpose.msra.mxu0 0.0
  %45 = vmatpush.xpose.msra.mxu0 0.0
  %46 = vmatpush.xpose.msra.mxu0 %v29
  %47 = vmatmul.f32.gmra.mxu0 %v26
  %v48 = vpop.f32.mrf.mxu0
  %v49 = vadd.f32 0.0, %v48
  %50 = vdwg.mxu0
  %v52 = vsel %vm24, %v21, 0
  %v55 = vsel %vm24, %v23, 0
  %57 = vmatpush.xpose.msra.mxu0 0.0
  %58 = vmatpush.xpose.msra.mxu0 0.0
  %59 = vmatpush.xpose.msra.mxu0 0.0
  %60 = vmatpush.xpose.msra.mxu0 0.0
  %61 = vmatpush.xpose.msra.mxu0 0.0
  %62 = vmatpush.xpose.msra.mxu0 0.0
  %63 = vmatpush.xpose.msra.mxu0 0.0
  %64 = vmatpush.xpose.msra.mxu0 0.0
  %65 = vmatpush.xpose.msra.mxu0 0.0
  %66 = vmatpush.xpose.msra.mxu0 0.0
  %67 = vmatpush.xpose.msra.mxu0 0.0
  %68 = vmatpush.xpose.msra.mxu0 0.0
  %69 = vmatpush.xpose.msra.mxu0 0.0
  %70 = vmatpush.xpose.msra.mxu0 0.0
  %71 = vmatpush.xpose.msra.mxu0 0.0
  %72 = vmatpush.xpose.msra.mxu0 %v55
  %73 = vmatmul.f32.gmra.mxu0 %v52
  %v74 = vpop.f32.mrf.mxu0
  %v75 = vadd.f32 0.0, %v74
  %76 = vdwg.mxu0
  %vm77 = vcmask 64512
  %v78 = vsel %vm77, %v49, -inf
  %79 = vmax.xlane.f32.xlu0 %v78
  %v80 = vpop.xlane.xlu0 %79
  %v81 = vsel %vm77, %v75, -inf
  %82 = vmax.xlane.f32.xlu0 %v81
  %v83 = vpop.xlane.xlu0 %82
  %v84 = vsub.f32 %v49, %v80
  %v85 = vsub.f32 %v75, %v83
  %v86 = vmul.f32 %v84, 1.442695
  %v87 = vpow.pop %v86
  %v88 = vmul.f32 %v85, 1.442695
  %v89 = vpow.pop %v88
  %v90 = vsel %vm77, %v87, 0.0
  %91 = vadd.xlane.f32.xlu0 %v90
  %v92 = vpop.xlane.xlu0 %91
  %v93 = vsel %vm77, %v89, 0.0
  %94 = vadd.xlane.f32.xlu0 %v93
  %v95 = vpop.xlane.xlu0 %94
  %v96 = vrcp.pop %v92
  %v97 = vmul.f32 %v92, %v96
  %v98 = vsub.f32 1.0, %v97
  %v99 = vmul.f32 %v96, %v98
  %v100 = vadd.f32 %v96, %v99
  %vm101 = vweird.f32 %v92
  %vm102 = vweird.f32 %v96
  %vm103 = vmor %vm101, %vm102
  %v104 = vsel %vm103, %v96, %v100
  %v105 = vand.u32 2147483647, %v92
  %vm106 = vcmp.eq.f32.partialorder %v105, 8.507059e+37
  %v107 = vand.u32 %v92, 2147483648
  %v108 = vor.u32 1.1754944e-38, %v107
  %v109 = vsel %vm106, %v108, %v104
  %v110 = vrcp.pop %v95
  %v111 = vmul.f32 %v95, %v110
  %v112 = vsub.f32 1.0, %v111
  %v113 = vmul.f32 %v110, %v112
  %v114 = vadd.f32 %v110, %v113
  %vm115 = vweird.f32 %v95
  %vm116 = vweird.f32 %v110
  %vm117 = vmor %vm115, %vm116
  %v118 = vsel %vm117, %v110, %v114
  %v119 = vand.u32 2147483647, %v95
  %vm120 = vcmp.eq.f32.partialorder %v119, 8.507059e+37
  %v121 = vand.u32 %v95, 2147483648
  %v122 = vor.u32 1.1754944e-38, %v121
  %v123 = vsel %vm120, %v122, %v118
  %v124 = vmul.f32 %v87, %v109
  %v125 = vmul.f32 %v89, %v123
  %v127 = vsel %vm77, %v124, 0
  %129 = vmatpush.msra.mxu0 0.0
  %130 = vmatpush.msra.mxu0 0.0
  %131 = vmatpush.msra.mxu0 0.0
  %132 = vmatpush.msra.mxu0 0.0
  %133 = vmatpush.msra.mxu0 0.0
  %134 = vmatpush.msra.mxu0 0.0
  %135 = vmatpush.msra.mxu0 0.0
  %136 = vmatpush.msra.mxu0 0.0
  %137 = vmatpush.msra.mxu0 0.0
  %138 = vmatpush.msra.mxu0 0.0
  %139 = vmatpush.msra.mxu0 0.0
  %140 = vmatpush.msra.mxu0 0.0
  %141 = vmatpush.msra.mxu0 0.0
  %142 = vmatpush.msra.mxu0 0.0
  %143 = vmatpush.msra.mxu0 0.0
  %144 = vmatpush.msra.mxu0 %v22
  %145 = vmatmul.f32.gmra.mxu0 %v127
  %v146 = vpop.f32.mrf.mxu0
  %v147 = vadd.f32 0.0, %v146
  %148 = vdwg.mxu0
  %v150 = vsel %vm77, %v125, 0
  %152 = vmatpush.msra.mxu0 0.0
  %153 = vmatpush.msra.mxu0 0.0
  %154 = vmatpush.msra.mxu0 0.0
  %155 = vmatpush.msra.mxu0 0.0
  %156 = vmatpush.msra.mxu0 0.0
  %157 = vmatpush.msra.mxu0 0.0
  %158 = vmatpush.msra.mxu0 0.0
  %159 = vmatpush.msra.mxu0 0.0
  %160 = vmatpush.msra.mxu0 0.0
  %161 = vmatpush.msra.mxu0 0.0
  %162 = vmatpush.msra.mxu0 0.0
  %163 = vmatpush.msra.mxu0 0.0
  %164 = vmatpush.msra.mxu0 0.0
  %165 = vmatpush.msra.mxu0 0.0
  %166 = vmatpush.msra.mxu0 0.0
  %167 = vmatpush.msra.mxu0 %v23
  %168 = vmatmul.f32.gmra.mxu0 %v150
  %v169 = vpop.f32.mrf.mxu0
  %v170 = vadd.f32 0.0, %v169
  %171 = vdwg.mxu0
  %v172 = vld [vmem:[%s2] sm:$0xff]
  %v173 = vld [vmem:[%s2 + $0x8] sm:$0xff]
  %v174 = vld [vmem:[%s2 + $0x10] sm:$0xff]
  %v175 = vld [vmem:[%s2 + $0x18] sm:$0xff]
  %v176 = vld [vmem:[%s3] sm:$0xff]
  %v177 = vld [vmem:[%s3 + $0x8] sm:$0xff]
  %v178 = vld [vmem:[%s3 + $0x10] sm:$0xff]
  %v179 = vld [vmem:[%s3 + $0x18] sm:$0xff]
  %180 = vmatpush.msra.mxu0 0.0
  %181 = vmatpush.msra.mxu0 0.0
  %182 = vmatpush.msra.mxu0 0.0
  %183 = vmatpush.msra.mxu0 0.0
  %184 = vmatpush.msra.mxu0 0.0
  %185 = vmatpush.msra.mxu0 0.0
  %186 = vmatpush.msra.mxu0 0.0
  %187 = vmatpush.msra.mxu0 0.0
  %188 = vmatpush.msra.mxu0 0.0
  %189 = vmatpush.msra.mxu0 0.0
  %190 = vmatpush.msra.mxu0 0.0
  %191 = vmatpush.msra.mxu0 0.0
  %192 = vmatpush.msra.mxu0 %v179
  %193 = vmatpush.msra.mxu0 %v178
  %194 = vmatpush.msra.mxu0 %v177
  %195 = vmatpush.msra.mxu0 %v176
  %196 = vmatmul.f32.gmra.mxu0 %v26
  %v197 = vpop.f32.mrf.mxu0
  %v198 = vadd.f32 0.0, %v197
  %199 = vmatmul.f32.gmra.mxu0 %v52
  %v200 = vpop.f32.mrf.mxu0
  %v201 = vadd.f32 0.0, %v200
  %202 = vdwg.mxu0
  %v204 = vsel %vm24, %v147, 0
  %v207 = vsel %vm24, %v170, 0
  %209 = vmatpush.msra.mxu0 0.0
  %210 = vmatpush.msra.mxu0 0.0
  %211 = vmatpush.msra.mxu0 0.0
  %212 = vmatpush.msra.mxu0 0.0
  %213 = vmatpush.msra.mxu0 0.0
  %214 = vmatpush.msra.mxu0 0.0
  %215 = vmatpush.msra.mxu0 0.0
  %216 = vmatpush.msra.mxu0 0.0
  %217 = vmatpush.msra.mxu0 0.0
  %218 = vmatpush.msra.mxu0 0.0
  %219 = vmatpush.msra.mxu0 0.0
  %220 = vmatpush.msra.mxu0 0.0
  %221 = vmatpush.msra.mxu0 %v175
  %222 = vmatpush.msra.mxu0 %v174
  %223 = vmatpush.msra.mxu0 %v173
  %224 = vmatpush.msra.mxu0 %v172
  %225 = vmatmul.f32.gmra.mxu0 %v204
  %v226 = vpop.f32.mrf.mxu0
  %v227 = vadd.f32 %v198, %v226
  %228 = vmatmul.f32.gmra.mxu0 %v207
  %v229 = vpop.f32.mrf.mxu0
  %v230 = vadd.f32 %v201, %v229
  %231 = vdwg.mxu0
  %v232 = vtanh.pop %v227
  %v233 = vtanh.pop %v230
  %234 = vst.msk [vmem:[%s4] sm:$0xff] %vm24, %v232
  %235 = vst.msk [vmem:[%s4 + $0x8] sm:$0xff] %vm24, %v233
  %236 = vst.msk [vmem:[%s5] sm:$0xff] %vm77, %v124
  %237 = vst.msk [vmem:[%s5 + $0x8] sm:$0xff] %vm77, %v125
  %238 = vst.msk [vmem:[%s6] sm:$0xff] %vm24, %v147
  %239 = vst.msk [vmem:[%s6 + $0x8] sm:$0xff] %vm24, %v170
  %240 = vrot.lane.b32.xlu0 %v20, 32
  %v241 = vpop.permute.xlu0 %240
  %242 = vrot.lane.b32.xlu0 %v21, 32
  %v243 = vpop.permute.xlu0 %242
  %vm246 = vcmask 523520
  %247 = vst.msk [vmem:[%s6] sm:$0xff] %vm246, %v241
  %248 = vst.msk [vmem:[%s6 + $0x8] sm:$0xff] %vm246, %v243
  // Predicated region
  $region18: #{_global_attention_3d.1} parent=0 // pred_check
    _
  $region19: #{_global_attention_3d.1} parent=0 // pred_check_branch
    %250 = sbr.rel (0) target = $region21
  $region20: #{_global_attention_3d.1} parent=0 // pred_region
    _
  $region21: #{_global_attention_3d.1} parent=0 // pred_fallthru
    _
  // Predicated region
  $region22: #{_global_attention_3d.1} parent=0 // pred_check
    _
  $region23: #{_global_attention_3d.1} parent=0 // pred_check_branch
    %252 = sbr.rel (0) target = $region25
  $region24: #{_global_attention_3d.1} parent=0 // pred_region
    _
  $region25: #{_global_attention_3d.1} parent=0 // pred_fallthru
    _
  // Predicated region
  $region26: #{_global_attention_3d.1} parent=0 // pred_check
    _
  $region27: #{_global_attention_3d.1} parent=0 // pred_check_branch
    %254 = sbr.rel (0) target = $region29
  $region28: #{_global_attention_3d.1} parent=0 // pred_region
    _
  $region29: #{_global_attention_3d.1} parent=0 // pred_fallthru
    _
  // Predicated region
  $region30: #{_global_attention_3d.1} parent=0 // pred_check
    _
  $region31: #{_global_attention_3d.1} parent=0 // pred_check_branch
    %256 = sbr.rel (0) target = $region33
  $region32: #{_global_attention_3d.1} parent=0 // pred_region
    _
  $region33: #{_global_attention_3d.1} parent=0 // pred_fallthru
    _
  // Predicated region
  $region34: #{_global_attention_3d.1} parent=0 // pred_check
    _
  $region35: #{_global_attention_3d.1} parent=0 // pred_check_branch
    %258 = sbr.rel (0) target = $region37
  $region36: #{_global_attention_3d.1} parent=0 // pred_region
    _
  $region37: #{_global_attention_3d.1} parent=0 // pred_fallthru
    _
  // Predicated region
  $region38: #{_global_attention_3d.1} parent=0 // pred_check
    _
  $region39: #{_global_attention_3d.1} parent=0 // pred_check_branch
    %260 = sbr.rel (0) target = $region41
  $region40: #{_global_attention_3d.1} parent=0 // pred_region
    _
  $region41: #{_global_attention_3d.1} parent=0 // pred_fallthru
    _

</llo_original>
